<compile_context>
chip_gen: v7x
topology: tpu7x:2x2x1
jax: 0.10.0
libtpu: 0.0.40
codegen_flags: <defaults>
</compile_context>

<pallas_src>
import functools

import jax
import jax.numpy as jnp
from jax.experimental import pallas as pl
from jax.experimental.pallas import tpu as pltpu

MARGIN = 1.0
EPS = 1e-6          # torch.nn.functional.pairwise_distance default eps
_D_CHUNK = 512      # lane-aligned feature chunk; bounds f32 temporaries to (TB, 512)


def _round_up(x: int, m: int) -> int:
    return ((x + m - 1) // m) * m


def _vmem_capacity_bytes() -> int:
    try:
        return int(pltpu.get_tpu_info().vmem_capacity_bytes)
    except Exception:
        return 64 << 20  # conservative (v7x-sized) default if query unavailable


def _contrastive_loss_kernel(o1_ref, o2_ref, lbl_ref, out_ref, *,
                             batch, tile_b, margin, d_chunk):
    # o1_ref/o2_ref: (TB, D) native dtype ; lbl_ref: (TB, 1) ; out_ref: (1, 8, 128) f32
    i = pl.program_id(0)
    D = o1_ref.shape[1]

    # Accumulate squared distance over feature chunks so the f32 upcast / diff
    # temporaries stay bounded at (TB, d_chunk) regardless of how wide D is.
    d2 = jnp.zeros((tile_b, 1), jnp.float32)
    for c0 in range(0, D, d_chunk):
        c1 = min(D, c0 + d_chunk)
        a = o1_ref[:, c0:c1].astype(jnp.float32)
        b = o2_ref[:, c0:c1].astype(jnp.float32)
        diff = a - b + EPS
        d2 = d2 + jnp.sum(diff * diff, axis=-1, keepdims=True)

    d = jnp.sqrt(d2)                                            # (TB, 1)
    lbl = lbl_ref[...].astype(jnp.float32)                      # (TB, 1)
    hinge = jnp.maximum(margin - d, 0.0)
    # torch squares the sqrt'd distance, so use d*d (not d2) to match rounding.
    per_example = lbl * (d * d) + (1.0 - lbl) * (hinge * hinge)  # (TB, 1)

    # Mask padded tail rows (garbage / stale VMEM in the boundary block).
    row = i * tile_b + jax.lax.broadcasted_iota(jnp.int32, (tile_b, 1), 0)
    per_example = jnp.where(row < batch, per_example, 0.0)

    tile_sum = jnp.sum(per_example)
    # Lane-dense, full-vreg (unmasked) store of this tile's partial sum.
    out_ref[...] = jnp.full((1, 8, 128), tile_sum, dtype=jnp.float32)


def contrastive_loss(output1: jax.Array, output2: jax.Array, label: jax.Array,
                     margin: float = MARGIN) -> jax.Array:
    """output1, output2: [B, D] ; label: [B] -> scalar float32 loss."""
    B, D = output1.shape
    lbl2d = label.reshape(B, 1)

    itemsize = jnp.dtype(output1.dtype).itemsize
    d_chunk = min(D, _D_CHUNK)

    # --- generation-aware VMEM / tile sizing -------------------------------
    vmem_cap = _vmem_capacity_bytes()
    # Leave ~25% headroom: 128 MiB -> 96 MiB (v5e/v6e), 64 MiB -> 48 MiB (v7x).
    limit_cap = int(min(96 << 20, (vmem_cap * 3) // 4))
    # Per-input tile target: bigger on 128 MiB chips, smaller on v7x.
    tile_target = (10 << 20) if vmem_cap >= (96 << 20) else (5 << 20)

    # VMEM bytes resident per tile row:
    #   o1,o2 native dtype x 2 pipeline buffers each
    # + f32 upcast/diff/square temporaries over one feature chunk (~3x)
    # + lane-padded (TB, 1) label x 2 buffers
    # + misc per-row f32 columns (d2, d, hinge, per_example, row index).
    per_row_bytes = 4 * D * itemsize + 3 * d_chunk * 4 + 2 * 128 * 4 + 64

    rows_from_target = max(8, ((tile_target // max(1, D * itemsize)) // 8) * 8)
    rows_from_budget = max(8, (((limit_cap - (4 << 20)) // per_row_bytes) // 8) * 8)
    tile_b = min(_round_up(B, 8), rows_from_target, rows_from_budget)
    # Guarantee >= 2 grid steps for moderate B so both v7x TensorCores get work.
    if B >= 16:
        tile_b = min(tile_b, _round_up((B + 1) // 2, 8))
    tile_b = max(8, tile_b)

    num_tiles = (B + tile_b - 1) // tile_b
    needed_bytes = per_row_bytes * tile_b + 2 * 8 * 128 * 4
    vmem_bytes = int(min(limit_cap, max(16 << 20, needed_bytes + (4 << 20))))

    kernel = functools.partial(
        _contrastive_loss_kernel,
        batch=B, tile_b=tile_b, margin=margin, d_chunk=d_chunk)

    partials = pl.pallas_call(
        kernel,
        out_shape=jax.ShapeDtypeStruct((num_tiles, 8, 128), jnp.float32),
        grid_spec=pltpu.PrefetchScalarGridSpec(
            num_scalar_prefetch=0,
            grid=(num_tiles,),
            in_specs=[
                pl.BlockSpec((tile_b, D), lambda i: (i, 0)),
                pl.BlockSpec((tile_b, D), lambda i: (i, 0)),
                pl.BlockSpec((tile_b, 1), lambda i: (i, 0)),
            ],
            out_specs=pl.BlockSpec((1, 8, 128), lambda i: (i, 0, 0)),
        ),
        compiler_params=pltpu.CompilerParams(
            dimension_semantics=("parallel",),
            vmem_limit_bytes=vmem_bytes,
        ),
    )(output1, output2, lbl2d)

    # Tiny epilogue: sum of per-tile partials, divided by the true batch size.
    return jnp.sum(partials[:, 0, 0]) / jnp.float32(B)


def contrastive_loss_ref(output1, output2, label, margin=MARGIN):
    # Pure-JAX reference mirroring the PyTorch module.
    o1 = output1.astype(jnp.float32)
    o2 = output2.astype(jnp.float32)
    lbl = label.astype(jnp.float32)
    d = jnp.sqrt(jnp.sum((o1 - o2 + EPS) ** 2, axis=-1))
    return jnp.mean(lbl * d**2 + (1.0 - lbl) * jnp.maximum(margin - d, 0.0) ** 2)


if __name__ == "__main__":
    key = jax.random.PRNGKey(0)
    k1, k2, k3 = jax.random.split(key, 3)

    B, D = 8, 32
    output1 = jax.random.normal(k1, (B, D), dtype=jnp.float32)
    output2 = jax.random.normal(k2, (B, D), dtype=jnp.float32)
    label = jax.random.bernoulli(k3, 0.5, (B,)).astype(jnp.float32)

    loss = contrastive_loss(output1, output2, label)
    jax.block_until_ready(loss)

    ref = contrastive_loss_ref(output1, output2, label)
    assert jnp.allclose(loss, ref, rtol=1e-5, atol=1e-5), (loss, ref)

    print("KERNEL_OK")
</pallas_src>

<mosaic_0001>
module attributes {stable_mosaic.version = 11 : i64} {
  func.func @_contrastive_loss_kernel(%arg0: i32, %arg1: memref<8x32xf32, #tpu.memory_space<vmem>>, %arg2: memref<8x32xf32, #tpu.memory_space<vmem>>, %arg3: memref<8x1xf32, #tpu.memory_space<vmem>>, %arg4: memref<1x8x128xf32, #tpu.memory_space<vmem>>) attributes {dimension_semantics = [#tpu.dimension_semantics<parallel>], iteration_bounds = array<i64: 1>, scalar_prefetch = 0 : i64, scratch_operands = 0 : i64, tpu.core_type = #tpu.core_type<tc>, window_params = [{transform_indices = @transform_0, window_bounds = array<i64: 8, 32>}, {transform_indices = @transform_1, window_bounds = array<i64: 8, 32>}, {transform_indices = @transform_2, window_bounds = array<i64: 8, 1>}, {transform_indices = @transform_3, window_bounds = array<i64: 1, 8, 128>}]} {
    %cst = arith.constant 0.000000e+00 : f32
    %0 = vector.broadcast %cst : f32 to vector<8x1xf32>
    %c0 = arith.constant 0 : index
    %c0_0 = arith.constant 0 : index
    %1 = vector.load %arg1[%c0, %c0_0] : memref<8x32xf32, #tpu.memory_space<vmem>>, vector<8x32xf32>
    %c0_1 = arith.constant 0 : index
    %c0_2 = arith.constant 0 : index
    %2 = vector.load %arg2[%c0_1, %c0_2] : memref<8x32xf32, #tpu.memory_space<vmem>>, vector<8x32xf32>
    %3 = arith.subf %1, %2 : vector<8x32xf32>
    %cst_3 = arith.constant 9.99999997E-7 : f32
    %4 = vector.broadcast %cst_3 : f32 to vector<8x32xf32>
    %5 = arith.addf %3, %4 : vector<8x32xf32>
    %6 = arith.mulf %5, %5 : vector<8x32xf32>
    %cst_4 = arith.constant dense<0.000000e+00> : vector<8xf32>
    %7 = vector.multi_reduction <add>, %6, %cst_4 [1] : vector<8x32xf32> to vector<8xf32>
    %8 = vector.shape_cast %7 : vector<8xf32> to vector<8x1xf32>
    %9 = arith.addf %0, %8 : vector<8x1xf32>
    %10 = math.sqrt %9 : vector<8x1xf32>
    %c0_5 = arith.constant 0 : index
    %c0_6 = arith.constant 0 : index
    %11 = vector.load %arg3[%c0_5, %c0_6] : memref<8x1xf32, #tpu.memory_space<vmem>>, vector<8x1xf32>
    %cst_7 = arith.constant 1.000000e+00 : f32
    %12 = vector.broadcast %cst_7 : f32 to vector<8x1xf32>
    %13 = arith.subf %12, %10 : vector<8x1xf32>
    %cst_8 = arith.constant 0.000000e+00 : f32
    %14 = vector.broadcast %cst_8 : f32 to vector<8x1xf32>
    %15 = arith.maximumf %13, %14 : vector<8x1xf32>
    %16 = arith.mulf %10, %10 : vector<8x1xf32>
    %17 = arith.mulf %11, %16 : vector<8x1xf32>
    %cst_9 = arith.constant 1.000000e+00 : f32
    %18 = vector.broadcast %cst_9 : f32 to vector<8x1xf32>
    %19 = arith.subf %18, %11 : vector<8x1xf32>
    %20 = arith.mulf %15, %15 : vector<8x1xf32>
    %21 = arith.mulf %19, %20 : vector<8x1xf32>
    %22 = arith.addf %17, %21 : vector<8x1xf32>
    %c8_i32 = arith.constant 8 : i32
    %23 = arith.muli %arg0, %c8_i32 : i32
    %24 = tpu.iota {dimensions = array<i32: 0>} : vector<8x1xi32>
    %25 = vector.broadcast %23 : i32 to vector<8x1xi32>
    %26 = arith.addi %25, %24 : vector<8x1xi32>
    %c8_i32_10 = arith.constant 8 : i32
    %27 = vector.broadcast %c8_i32_10 : i32 to vector<8x1xi32>
    %28 = arith.cmpi slt, %26, %27 : vector<8x1xi32>
    %cst_11 = arith.constant 0.000000e+00 : f32
    %29 = vector.broadcast %cst_11 : f32 to vector<8x1xf32>
    %30 = arith.select %28, %22, %29 : vector<8x1xi1>, vector<8x1xf32>
    %31 = vector.shape_cast %30 : vector<8x1xf32> to vector<1x8x1xf32>
    %cst_12 = arith.constant dense<0.000000e+00> : vector<1xf32>
    %32 = vector.multi_reduction <add>, %31, %cst_12 [1, 2] : vector<1x8x1xf32> to vector<1xf32>
    %33 = vector.shape_cast %32 : vector<1xf32> to vector<1x1x1xf32>
    %34 = vector.extract %33[0, 0, 0] : f32 from vector<1x1x1xf32>
    %35 = vector.broadcast %34 : f32 to vector<1x8x128xf32>
    %c0_13 = arith.constant 0 : index
    %c0_14 = arith.constant 0 : index
    %c0_15 = arith.constant 0 : index
    %36 = vector.load %arg4[%c0_13, %c0_14, %c0_15] : memref<1x8x128xf32, #tpu.memory_space<vmem>>, vector<1x8x128xf32>
    tpu.vector_store %arg4[%c0_13, %c0_14, %c0_15], %35 {strides = array<i32>} : memref<1x8x128xf32, #tpu.memory_space<vmem>>, vector<1x8x128xf32>,
    return
  }
  func.func @transform_0(%arg0: i32) -> (i32, i32) {
    %c0_i32 = arith.constant 0 : i32
    %c0_i32_0 = arith.constant 0 : i32
    return %arg0, %c0_i32 : i32, i32
  }
  func.func @transform_1(%arg0: i32) -> (i32, i32) {
    %c0_i32 = arith.constant 0 : i32
    %c0_i32_0 = arith.constant 0 : i32
    return %arg0, %c0_i32 : i32, i32
  }
  func.func @transform_2(%arg0: i32) -> (i32, i32) {
    %c0_i32 = arith.constant 0 : i32
    %c0_i32_0 = arith.constant 0 : i32
    return %arg0, %c0_i32 : i32, i32
  }
  func.func @transform_3(%arg0: i32) -> (i32, i32, i32) {
    %c0_i32 = arith.constant 0 : i32
    %c0_i32_0 = arith.constant 0 : i32
    %c0_i32_1 = arith.constant 0 : i32
    return %arg0, %c0_i32, %c0_i32_0 : i32, i32, i32
  }
}

</mosaic_0001>

<llo_original>
// kernel: tpu_custom_call.1
$region0: #{tpu_custom_call.1}
  #allocation0 [shape = 'u32[]', space=smem, size = 0x4, offset = 0x4, fixed_abs, tag = 'smem constant byte address 0x4 - core index']
  #allocation1 [shape = 'u32[144,128]{1,0:T(1,128)}', space=vmem, size = 0x12000, scoped, tag = 'internal scratch']
  %s0 = inlined_call_operand.vmem [shape: f32[8,32], index: 0, kind: input, shape index: {}]
  %s1 = inlined_call_operand.hbm [shape: f32[8,32], index: 1, kind: input, shape index: {}]
  %s2 = inlined_call_operand.vmem [shape: f32[8,1], index: 2, kind: input, shape index: {}]
  %s3 = inlined_call_operand.hbm [shape: f32[1,8,128], index: 3, kind: output, shape index: {}]
  %s4 = sld [smem:[#allocation0]]
  $region26: #{tpu_custom_call.1} parent=0
    _
  %s6 = ssub.s32 1, %s4
  %s7 = scalar_select 0, %s6, %s4
  $region1: #{tpu_custom_call.1} parent=0
    #allocation2 [shape = 'u8[4096]{0}', space=vmem, size = 0x1000, scoped, tag = 'input window, operand 1, single buffered']
    #allocation3 [shape = 's32[1]{0}', space=sflag, size = 0x4, scoped, tag = 'scoped memory for tpu_custom_call.1']
    #allocation4 [shape = 's32[1]{0}', space=sflag, size = 0x4, scoped, tag = 'scoped memory for tpu_custom_call.1']
    #allocation5 [shape = 'u8[4096]{0}', space=vmem, size = 0x1000, scoped, tag = 'output window, operand 0, single buffered']
    %8 = vsyncpa [#allocation3], 0
    %9 = vsyncpa [#allocation4], 0
    // Predicated region
    $region2: #{tpu_custom_call.1} parent=1 // pred_check
      _
    $region3: #{tpu_custom_call.1} parent=1 // pred_check_branch
      %11 = sbr.rel (0) target = $region5
    $region4: #{tpu_custom_call.1} parent=1 // pred_region
      _
    $region5: #{tpu_custom_call.1} parent=1 // pred_fallthru
      _
    // Predicated region
    $region6: #{tpu_custom_call.1} parent=1 // pred_check
      _
    $region7: #{tpu_custom_call.1} parent=1 // pred_check_branch
      %13 = sbr.rel (0) target = $region9
    $region8: #{tpu_custom_call.1} parent=1 // pred_region
      %s15 = ssub.s32 128, 128
      %16 = vsyncadd [#allocation3], %s15
      %s18 = sshll.u32 [#allocation2], 4
      %s19 = int_to_ptr.vmem [resolvable:$true] %s18
      %21 = dma.hbm_to_vmem [thread:$0]  %s1, 128, %s19, [#allocation3]
    $region9: #{tpu_custom_call.1} parent=1 // pred_fallthru
      _
    // Predicated region
    $region10: #{tpu_custom_call.1} parent=1 // pred_check
      _
    $region11: #{tpu_custom_call.1} parent=1 // pred_check_branch
      %23 = sbr.rel (0) target = $region13
    $region12: #{tpu_custom_call.1} parent=1 // pred_region
      _
    $region13: #{tpu_custom_call.1} parent=1 // pred_fallthru
      _
    // Predicated region
    $region14: #{tpu_custom_call.1} parent=1 // pred_check
      _
    $region15: #{tpu_custom_call.1} parent=1 // pred_check_branch
      %25 = sbr.rel (0) target = $region17
    $region16: #{tpu_custom_call.1} parent=1 // pred_region
      %26 = dma.done [#allocation3], 128
    $region17: #{tpu_custom_call.1} parent=1 // pred_fallthru
      _
    %v27 = vld [vmem:[%s0] sm:$0xff]
    %v28 = vld [vmem:[#allocation2] sm:$0xff]
    %v29 = vsub.f32 %v27, %v28
    %v30 = vadd.f32 %v29, 1e-06
    %v31 = vmul.f32 %v30, %v30
    %vm32 = vcmask 261120
    %v33 = vsel %vm32, %v31, 0.0
    %34 = vadd.xlane.f32.xlu0 %v33
    %v35 = vpop.xlane.xlu0 %34
    %v36 = vadd.f32 %v35, 0.0
    %v37 = vrsqrt.pop %v36
    %v38 = vmul.f32 %v36, %v37
    %vm39 = vcmp.eq.f32.partialorder %v36, inf
    %v40 = vsel %vm39, %v36, %v38
    %vm41 = vcmp.eq.f32.partialorder %v36, 0.0
    %v42 = vand.u32 %v36, 2147483648
    %v43 = vsel %vm41, %v42, %v40
    %v44 = vld [vmem:[%s2] sm:$0xff]
    %v45 = vsub.f32 1.0, %v43
    %v46 = vmax.f32 %v45, 0.0
    %v47 = vmul.f32 %v43, %v43
    %v48 = vmul.f32 %v44, %v47
    %v49 = vsub.f32 1.0, %v44
    %v50 = vmul.f32 %v46, %v46
    %v51 = vmul.f32 %v49, %v50
    %v52 = vadd.f32 %v48, %v51
    %s53 = smul.u32 0, 8
    %v54 = vlaneseq
    %v55 = vshrl.u32 %v54, 7
    %v56 = vstv %s53
    %v57 = vadd.s32 %v56, %v55
    %vm58 = vcmp.lt.s32.totalorder %v57, 8
    %v59 = vsel %vm58, %v52, 0.0
    %vm60 = vcmask 7168
    %v61 = vsel %vm60, %v59, 0.0
    %62 = vadd.xlane.f32.xlu0 %v61
    %v63 = vpop.xlane.xlu0 %62
    %v64 = vrot.slane %v63, 4
    %v65 = vadd.f32 %v63, %v64
    %v66 = vrot.slane %v65, 2
    %v67 = vadd.f32 %v65, %v66
    %v68 = vrot.slane %v67, 1
    %v69 = vadd.f32 %v67, %v68
    %s70 = vtos %v69
    %v71 = vstv %s70
    %72 = vst [vmem:[#allocation5] sm:$0xff] %v71
    // Predicated region
    $region18: #{tpu_custom_call.1} parent=1 // pred_check
      _
    $region19: #{tpu_custom_call.1} parent=1 // pred_check_branch
      %74 = sbr.rel (0) target = $region21
    $region20: #{tpu_custom_call.1} parent=1 // pred_region
      %s76 = ssub.s32 128, 128
      %77 = vsyncadd [#allocation4], %s76
      %s79 = sshll.u32 [#allocation5], 4
      %s80 = int_to_ptr.vmem [resolvable:$true] %s79
      %82 = dma.vmem_to_hbm [thread:$0]  %s80, 128, %s3, [#allocation4]
    $region21: #{tpu_custom_call.1} parent=1 // pred_fallthru
      _
    // Predicated region
    $region22: #{tpu_custom_call.1} parent=1 // pred_check
      _
    $region23: #{tpu_custom_call.1} parent=1 // pred_check_branch
      %84 = sbr.rel (0) target = $region25
    $region24: #{tpu_custom_call.1} parent=1 // pred_region
      %85 = dma.done [#allocation4], 128
    $region25: #{tpu_custom_call.1} parent=1 // pred_fallthru
      _
    %86 = vsyncpa [#allocation3], 1
    %87 = vsyncpa [#allocation4], 1

</llo_original>
